<compile_context>
chip_gen: v5e
topology: v5e:2x2
jax: 0.10.0
libtpu: 0.0.40
codegen_flags: <defaults>
</compile_context>

<pallas_src>
import math

import jax
import jax.numpy as jnp
from jax.experimental import pallas as pl
from jax.experimental.pallas import tpu as pltpu


def _pe_kernel_dot(x_ref, w_ref, o_ref):
    # x_ref: (TN, G+1)  G consecutive positions per packed row + ones column
    # w_ref: (G+1, W)   W = G*D; rows 0..G-1 = block-diagonal broadcast of
    #                   div_rep, row G = per-column phase (0 for sin cols,
    #                   pi/2 for cos cols, since cos(t) == sin(t + pi/2))
    # o_ref: (TN, W)    lane-dense packed output (W is a multiple of 128)
    arg = jnp.dot(
        x_ref[...],
        w_ref[...],
        preferred_element_type=jnp.float32,
        precision=jax.lax.Precision.HIGHEST,  # keep x*div at f32 accuracy
    )
    o_ref[...] = jnp.sin(arg).astype(o_ref.dtype)


def _pe_kernel_bcast(x_ref, w_ref, phase_ref, o_ref):
    # G == 1 path (D already a multiple of 128): exact f32 VPU broadcast.
    # x_ref: (TN, 1), w_ref: (1, W), phase_ref: (1, W), o_ref: (TN, W)
    o_ref[...] = jnp.sin(x_ref[...] * w_ref[...] + phase_ref[...]).astype(o_ref.dtype)


def _round_up(a, b):
    return ((a + b - 1) // b) * b


def _cdiv(a, b):
    return (a + b - 1) // b


def arbitrary_position_encoder(x, input_dim, *, row_tile=8192,
                               out_dtype=jnp.float32):
    """JAX/Pallas equivalent of ArbitraryPositionEncoder.forward.

    x: (N,) float positions.  Returns (N, input_dim) encoding with
    out[:, 0::2] = sin(x[:, None] * div_term), out[:, 1::2] = cos(...).
    out_dtype=jnp.bfloat16 halves HBM write bytes (useful on v5e/v6e where
    this kernel is HBM-write-bound); default float32 matches the PyTorch ref.
    """
    D = int(input_dim)
    assert D % 2 == 0, "input_dim assumed even (standard PE)"
    N = int(x.shape[0])

    # Per-column frequency and phase: column d uses div_term[d // 2];
    # odd (cos) columns are even (sin) columns with a +pi/2 phase shift.
    half = jnp.exp(
        jnp.arange(0, D, 2, dtype=jnp.float32) * (-(math.log(10000.0) / D))
    )                                                            # (D/2,)
    div_rep = jnp.repeat(half, 2)                                # (D,)
    phase = jnp.where(jnp.arange(D) % 2 == 0, 0.0,
                      jnp.pi / 2).astype(jnp.float32)            # (D,)

    # Lane packing: G = 128 // gcd(D,128) consecutive positions per output
    # row -> packed width W = lcm(D,128), always a multiple of 128, so every
    # store is a full-width (unmasked) vst even for awkward D (96, 160, ...).
    G = 128 // math.gcd(D, 128)
    W = G * D

    # Row tiling: multiples of 8 sublanes, ~4 MiB output blocks (8 MiB
    # double-buffered + ~4 MiB f32 arg temp + tiny input blocks ~= 12-13 MiB),
    # safe on v5e/v6e (128 MiB VMEM) and v7x (64 MiB) with a 32 MiB limit.
    rows_needed = _cdiv(N, G)
    out_bytes = jnp.dtype(out_dtype).itemsize
    max_tn = max(8, (4 * 1024 * 1024) // (W * out_bytes))
    tn_cap = max(8, (min(row_tile, max_tn) // 8) * 8)
    if rows_needed <= tn_cap:
        tn = _round_up(rows_needed, 8)
    else:
        n_tiles = _cdiv(rows_needed, tn_cap)           # balance tiles to
        tn = _round_up(_cdiv(rows_needed, n_tiles), 8)  # bound padding waste
    rows_padded = _round_up(rows_needed, tn)
    n_padded = rows_padded * G

    x_flat = x.astype(jnp.float32).reshape(N)
    x_padded = jnp.pad(x_flat, (0, n_padded - N))
    x_packed = x_padded.reshape(rows_padded, G)                  # (rows, G)

    compiler_params = pltpu.CompilerParams(
        dimension_semantics=("parallel",),       # 2 TCs on v7x
        vmem_limit_bytes=32 * 1024 * 1024,       # v5e scoped default is 16 MiB
    )

    if G == 1:
        # D is a lane multiple: plain VPU broadcast, exact f32 products.
        out_packed = pl.pallas_call(
            _pe_kernel_bcast,
            out_shape=jax.ShapeDtypeStruct((rows_padded, W), out_dtype),
            grid=(rows_padded // tn,),
            in_specs=[
                pl.BlockSpec((tn, 1), lambda i: (i, 0)),   # positions
                pl.BlockSpec((1, W), lambda i: (0, 0)),    # div_rep (constant)
                pl.BlockSpec((1, W), lambda i: (0, 0)),    # phase (constant)
            ],
            out_specs=pl.BlockSpec((tn, W), lambda i: (i, 0)),
            compiler_params=compiler_params,
        )(x_packed, div_rep.reshape(1, W), phase.reshape(1, W))
    else:
        # Block-diagonal broadcast weight with the phase folded in as one
        # extra row driven by a trailing ones column on x.
        w = (jnp.eye(G, dtype=jnp.float32)[:, :, None]
             * div_rep[None, None, :]).reshape(G, W)             # (G, W)
        w_aug = jnp.concatenate(
            [w, jnp.tile(phase, (G,)).reshape(1, W)], axis=0)    # (G+1, W)
        x_aug = jnp.concatenate(
            [x_packed, jnp.ones((rows_padded, 1), jnp.float32)], axis=1)

        out_packed = pl.pallas_call(
            _pe_kernel_dot,
            out_shape=jax.ShapeDtypeStruct((rows_padded, W), out_dtype),
            grid=(rows_padded // tn,),
            in_specs=[
                pl.BlockSpec((tn, G + 1), lambda i: (i, 0)),  # positions + 1s
                pl.BlockSpec((G + 1, W), lambda i: (0, 0)),   # weight+phase
            ],
            out_specs=pl.BlockSpec((tn, W), lambda i: (i, 0)),
            compiler_params=compiler_params,
        )(x_aug, w_aug)

    # Free row-major unpack back to (N, D), then drop padding rows.
    return out_packed.reshape(rows_padded * G, D)[:N]


def _reference(x, input_dim):
    """Pure-JAX reference mirroring the PyTorch forward."""
    div_term = jnp.exp(
        jnp.arange(0, input_dim, 2, dtype=jnp.float32)
        * (-(math.log(10000.0) / input_dim))
    )
    prod = x.astype(jnp.float32)[:, None] * div_term[None, :]   # (N, D/2)
    out = jnp.zeros((x.shape[0], input_dim), jnp.float32)
    out = out.at[:, 0::2].set(jnp.sin(prod))
    out = out.at[:, 1::2].set(jnp.cos(prod))
    return out


if __name__ == "__main__":
    key = jax.random.PRNGKey(0)
    k1, k2, k3 = jax.random.split(key, 3)

    # Primary small-shape check (module-typical): N=8 positions, input_dim=32.
    N, INPUT_DIM = 8, 32
    x = jax.random.uniform(k1, (N,), jnp.float32, 0.0, 100.0)
    pe = jax.block_until_ready(arbitrary_position_encoder(x, INPUT_DIM))
    ref = _reference(x, INPUT_DIM)
    assert pe.shape == (N, INPUT_DIM) and pe.dtype == jnp.float32
    assert jnp.allclose(pe, ref, atol=1e-4, rtol=1e-5), "mismatch (D=32)"

    # Awkward dim (D=96 -> G=4, W=384) + larger positions: exercises the
    # generalized lane packing and the HIGHEST-precision dot path (the
    # default-precision failure mode would show O(1) errors here).
    x2 = jax.random.uniform(k2, (300,), jnp.float32, 0.0, 1000.0)
    pe2 = jax.block_until_ready(arbitrary_position_encoder(x2, 96))
    ref2 = _reference(x2, 96)
    assert pe2.shape == (300, 96)
    # f32 arguments up to ~1e3 -> ulp-level argument differences dominate.
    assert jnp.allclose(pe2, ref2, atol=1e-2, rtol=1e-5), "mismatch (D=96)"

    # D multiple of 128 -> G=1 broadcast (non-MXU) path.
    x3 = jax.random.uniform(k3, (100,), jnp.float32, 0.0, 100.0)
    pe3 = jax.block_until_ready(arbitrary_position_encoder(x3, 128))
    ref3 = _reference(x3, 128)
    assert pe3.shape == (100, 128)
    assert jnp.allclose(pe3, ref3, atol=1e-4, rtol=1e-5), "mismatch (D=128)"

    print("KERNEL_OK")
</pallas_src>

<mosaic_0001>
module attributes {stable_mosaic.version = 11 : i64} {
  func.func @_pe_kernel_dot(%arg0: i32, %arg1: memref<8x5xf32, #tpu.memory_space<vmem>>, %arg2: memref<5x128xf32, #tpu.memory_space<vmem>>, %arg3: memref<8x128xf32, #tpu.memory_space<vmem>>) attributes {dimension_semantics = [#tpu.dimension_semantics<parallel>], iteration_bounds = array<i64: 1>, scalar_prefetch = 0 : i64, scratch_operands = 0 : i64, tpu.core_type = #tpu.core_type<tc>, window_params = [{transform_indices = @transform_0, window_bounds = array<i64: 8, 5>}, {pipeline_mode = #tpu.pipeline_mode<synchronous>, transform_indices = @transform_1, window_bounds = array<i64: 5, 128>}, {transform_indices = @transform_2, window_bounds = array<i64: 8, 128>}]} {
    %c0 = arith.constant 0 : index
    %c0_0 = arith.constant 0 : index
    %0 = vector.load %arg1[%c0, %c0_0] : memref<8x5xf32, #tpu.memory_space<vmem>>, vector<8x5xf32>
    %c0_1 = arith.constant 0 : index
    %c0_2 = arith.constant 0 : index
    %1 = vector.load %arg2[%c0_1, %c0_2] : memref<5x128xf32, #tpu.memory_space<vmem>>, vector<5x128xf32>
    %cst = arith.constant dense<0.000000e+00> : vector<8x128xf32>
    %2 = tpu.matmul %0, %1, %cst {dimension_numbers = #tpu.dot_dimension_numbers<[1], [0], [0], [1], [0, 0, 1, 1], [], []>, precision = #tpu.contract_precision<fp32>} : vector<8x5xf32>, vector<5x128xf32>, vector<8x128xf32> -> vector<8x128xf32>
    %3 = math.sin %2 : vector<8x128xf32>
    %c0_3 = arith.constant 0 : index
    %c0_4 = arith.constant 0 : index
    %4 = vector.load %arg3[%c0_3, %c0_4] : memref<8x128xf32, #tpu.memory_space<vmem>>, vector<8x128xf32>
    tpu.vector_store %arg3[%c0_3, %c0_4], %3 {strides = array<i32>} : memref<8x128xf32, #tpu.memory_space<vmem>>, vector<8x128xf32>,
    return
  }
  func.func @transform_0(%arg0: i32) -> (i32, i32) {
    %c0_i32 = arith.constant 0 : i32
    %c0_i32_0 = arith.constant 0 : i32
    return %arg0, %c0_i32 : i32, i32
  }
  func.func @transform_1(%arg0: i32) -> (i32, i32) {
    %c0_i32 = arith.constant 0 : i32
    %c0_i32_0 = arith.constant 0 : i32
    %c0_i32_1 = arith.constant 0 : i32
    return %c0_i32, %c0_i32_0 : i32, i32
  }
  func.func @transform_2(%arg0: i32) -> (i32, i32) {
    %c0_i32 = arith.constant 0 : i32
    %c0_i32_0 = arith.constant 0 : i32
    return %arg0, %c0_i32 : i32, i32
  }
}

</mosaic_0001>

<llo_original>
// kernel: tpu_custom_call.1
$region0: #{tpu_custom_call.1}
  #allocation0 [shape = 'u32[]', space=smem, size = 0x4, offset = 0x4, fixed_abs, tag = 'smem constant byte address 0x4 - core index']
  #allocation1 [shape = 'u32[72,128]{1,0:T(1,128)}', space=vmem, size = 0x9000, scoped, tag = 'internal scratch']
  %s0 = inlined_call_operand.hbm [shape: f32[8,5], index: 0, kind: input, shape index: {}]
  %s1 = inlined_call_operand.hbm [shape: f32[5,128], index: 1, kind: input, shape index: {}]
  %s2 = inlined_call_operand.hbm [shape: f32[8,128], index: 2, kind: output, shape index: {}]
  %s3 = sld [smem:[#allocation0]]
  $region26: #{tpu_custom_call.1} parent=0
    _
  %s5 = ssub.s32 1, %s3
  %s6 = scalar_select 0, %s5, %s3
  $region1: #{tpu_custom_call.1} parent=0
    #allocation2 [shape = 'u8[4096]{0}', space=vmem, size = 0x1000, scoped, tag = 'input window, operand 0, single buffered']
    #allocation3 [shape = 's32[1]{0}', space=sflag, size = 0x4, scoped, tag = 'scoped memory for tpu_custom_call.1']
    #allocation4 [shape = 's32[1]{0}', space=sflag, size = 0x4, scoped, tag = 'scoped memory for tpu_custom_call.1']
    #allocation5 [shape = 'u8[4096]{0}', space=vmem, size = 0x1000, scoped, tag = 'input window, operand 1, single buffered']
    #allocation6 [shape = 's32[1]{0}', space=sflag, size = 0x4, scoped, tag = 'scoped memory for tpu_custom_call.1']
    #allocation7 [shape = 'u8[4096]{0}', space=vmem, size = 0x1000, scoped, tag = 'output window, operand 0, single buffered']
    %7 = vsyncpa [#allocation3], 0
    %8 = vsyncpa [#allocation6], 0
    %9 = vsyncpa [#allocation4], 0
    // Predicated region
    $region2: #{tpu_custom_call.1} parent=1 // pred_check
      _
    $region3: #{tpu_custom_call.1} parent=1 // pred_check_branch
      %11 = sbr.rel (0) target = $region5
    $region4: #{tpu_custom_call.1} parent=1 // pred_region
      %13 = vsyncadd [#allocation3], 0
      %s15 = sshll.u32 %s0, 4
      %s16 = int_to_ptr.hbm [resolvable:$true] %s15
      %s17 = sshll.u32 [#allocation2], 4
      %s18 = int_to_ptr.vmem [resolvable:$true] %s17
      %20 = dma.hbm_to_vmem [thread:$0]  %s16, 128, %s18, [#allocation3]
    $region5: #{tpu_custom_call.1} parent=1 // pred_fallthru
      _
    // Predicated region
    $region6: #{tpu_custom_call.1} parent=1 // pred_check
      _
    $region7: #{tpu_custom_call.1} parent=1 // pred_check_branch
      %22 = sbr.rel (0) target = $region9
    $region8: #{tpu_custom_call.1} parent=1 // pred_region
      %24 = vsyncadd [#allocation6], 0
      %s26 = sshll.u32 %s1, 4
      %s27 = int_to_ptr.hbm [resolvable:$true] %s26
      %s28 = sshll.u32 [#allocation5], 4
      %s29 = int_to_ptr.vmem [resolvable:$true] %s28
      %31 = dma.hbm_to_vmem [thread:$0]  %s27, 128, %s29, [#allocation6]
    $region9: #{tpu_custom_call.1} parent=1 // pred_fallthru
      _
    // Predicated region
    $region10: #{tpu_custom_call.1} parent=1 // pred_check
      _
    $region11: #{tpu_custom_call.1} parent=1 // pred_check_branch
      %33 = sbr.rel (0) target = $region13
    $region12: #{tpu_custom_call.1} parent=1 // pred_region
      %35 = dma.done [#allocation3], 128
    $region13: #{tpu_custom_call.1} parent=1 // pred_fallthru
      _
    // Predicated region
    $region14: #{tpu_custom_call.1} parent=1 // pred_check
      _
    $region15: #{tpu_custom_call.1} parent=1 // pred_check_branch
      %37 = sbr.rel (0) target = $region17
    $region16: #{tpu_custom_call.1} parent=1 // pred_region
      %39 = dma.done [#allocation6], 128
    $region17: #{tpu_custom_call.1} parent=1 // pred_fallthru
      _
    %v40 = vld [vmem:[#allocation2] sm:$0xff]
    %v41 = vld [vmem:[#allocation5] sm:$0x1f]
    %vm42 = vcmask 39936
    %v44 = vsel %vm42, %v40, 0
    %vm46 = vcmask 1044480
    %v48 = vsel %vm46, %v41, 0
    %50 = vmatpush.msra.mxu0 0.0
    %51 = vmatpush.msra.mxu0 0.0
    %52 = vmatpush.msra.mxu0 0.0
    %53 = vmatpush.msra.mxu0 0.0
    %54 = vmatpush.msra.mxu0 0.0
    %55 = vmatpush.msra.mxu0 0.0
    %56 = vmatpush.msra.mxu0 0.0
    %57 = vmatpush.msra.mxu0 0.0
    %58 = vmatpush.msra.mxu0 0.0
    %59 = vmatpush.msra.mxu0 0.0
    %60 = vmatpush.msra.mxu0 0.0
    %61 = vmatpush.msra.mxu0 0.0
    %62 = vmatpush.msra.mxu0 0.0
    %63 = vmatpush.msra.mxu0 0.0
    %64 = vmatpush.msra.mxu0 0.0
    %v65 = vand.u32 %v48, 4294901760
    %66 = vmatpush.msra.mxu0 %v65
    %v67 = vand.u32 %v44, 4294901760
    %v68 = vsub.f32 %v44, %v67
    %v69 = vand.u32 %v68, 4294901760
    %v70 = vsub.f32 %v68, %v69
    %v71 = vand.u32 %v70, 4294901760
    %72 = vmatmul.f32.gmra.mxu0 %v71
    %v73 = vpop.f32.mrf.mxu0
    %v74 = vadd.f32 0.0, %v73
    %75 = vdwg.mxu0
    %76 = vmatpush.msra.mxu0 0.0
    %77 = vmatpush.msra.mxu0 0.0
    %78 = vmatpush.msra.mxu0 0.0
    %79 = vmatpush.msra.mxu0 0.0
    %80 = vmatpush.msra.mxu0 0.0
    %81 = vmatpush.msra.mxu0 0.0
    %82 = vmatpush.msra.mxu0 0.0
    %83 = vmatpush.msra.mxu0 0.0
    %84 = vmatpush.msra.mxu0 0.0
    %85 = vmatpush.msra.mxu0 0.0
    %86 = vmatpush.msra.mxu0 0.0
    %87 = vmatpush.msra.mxu0 0.0
    %88 = vmatpush.msra.mxu0 0.0
    %89 = vmatpush.msra.mxu0 0.0
    %90 = vmatpush.msra.mxu0 0.0
    %v91 = vand.u32 %v48, 4294901760
    %v92 = vsub.f32 %v48, %v91
    %v93 = vand.u32 %v92, 4294901760
    %v94 = vsub.f32 %v92, %v93
    %v95 = vand.u32 %v94, 4294901760
    %96 = vmatpush.msra.mxu0 %v95
    %v97 = vand.u32 %v44, 4294901760
    %98 = vmatmul.f32.gmra.mxu0 %v97
    %v99 = vpop.f32.mrf.mxu0
    %v100 = vadd.f32 %v74, %v99
    %101 = vdwg.mxu0
    %102 = vmatpush.msra.mxu0 0.0
    %103 = vmatpush.msra.mxu0 0.0
    %104 = vmatpush.msra.mxu0 0.0
    %105 = vmatpush.msra.mxu0 0.0
    %106 = vmatpush.msra.mxu0 0.0
    %107 = vmatpush.msra.mxu0 0.0
    %108 = vmatpush.msra.mxu0 0.0
    %109 = vmatpush.msra.mxu0 0.0
    %110 = vmatpush.msra.mxu0 0.0
    %111 = vmatpush.msra.mxu0 0.0
    %112 = vmatpush.msra.mxu0 0.0
    %113 = vmatpush.msra.mxu0 0.0
    %114 = vmatpush.msra.mxu0 0.0
    %115 = vmatpush.msra.mxu0 0.0
    %116 = vmatpush.msra.mxu0 0.0
    %v117 = vand.u32 %v48, 4294901760
    %v118 = vsub.f32 %v48, %v117
    %119 = vmatpush.msra.mxu0 %v118
    %v120 = vand.u32 %v44, 4294901760
    %v121 = vsub.f32 %v44, %v120
    %122 = vmatmul.f32.gmra.mxu0 %v121
    %v123 = vpop.f32.mrf.mxu0
    %v124 = vadd.f32 %v100, %v123
    %125 = vdwg.mxu0
    %126 = vmatpush.msra.mxu0 0.0
    %127 = vmatpush.msra.mxu0 0.0
    %128 = vmatpush.msra.mxu0 0.0
    %129 = vmatpush.msra.mxu0 0.0
    %130 = vmatpush.msra.mxu0 0.0
    %131 = vmatpush.msra.mxu0 0.0
    %132 = vmatpush.msra.mxu0 0.0
    %133 = vmatpush.msra.mxu0 0.0
    %134 = vmatpush.msra.mxu0 0.0
    %135 = vmatpush.msra.mxu0 0.0
    %136 = vmatpush.msra.mxu0 0.0
    %137 = vmatpush.msra.mxu0 0.0
    %138 = vmatpush.msra.mxu0 0.0
    %139 = vmatpush.msra.mxu0 0.0
    %140 = vmatpush.msra.mxu0 0.0
    %v141 = vand.u32 %v48, 4294901760
    %142 = vmatpush.msra.mxu0 %v141
    %v143 = vand.u32 %v44, 4294901760
    %v144 = vsub.f32 %v44, %v143
    %v145 = vand.u32 %v144, 4294901760
    %146 = vmatmul.f32.gmra.mxu0 %v145
    %v147 = vpop.f32.mrf.mxu0
    %v148 = vadd.f32 %v124, %v147
    %149 = vdwg.mxu0
    %150 = vmatpush.msra.mxu0 0.0
    %151 = vmatpush.msra.mxu0 0.0
    %152 = vmatpush.msra.mxu0 0.0
    %153 = vmatpush.msra.mxu0 0.0
    %154 = vmatpush.msra.mxu0 0.0
    %155 = vmatpush.msra.mxu0 0.0
    %156 = vmatpush.msra.mxu0 0.0
    %157 = vmatpush.msra.mxu0 0.0
    %158 = vmatpush.msra.mxu0 0.0
    %159 = vmatpush.msra.mxu0 0.0
    %160 = vmatpush.msra.mxu0 0.0
    %161 = vmatpush.msra.mxu0 0.0
    %162 = vmatpush.msra.mxu0 0.0
    %163 = vmatpush.msra.mxu0 0.0
    %164 = vmatpush.msra.mxu0 0.0
    %v165 = vand.u32 %v48, 4294901760
    %v166 = vsub.f32 %v48, %v165
    %v167 = vand.u32 %v166, 4294901760
    %168 = vmatpush.msra.mxu0 %v167
    %v169 = vand.u32 %v44, 4294901760
    %170 = vmatmul.f32.gmra.mxu0 %v169
    %v171 = vpop.f32.mrf.mxu0
    %v172 = vadd.f32 %v148, %v171
    %173 = vdwg.mxu0
    %174 = vmatpush.msra.mxu0 0.0
    %175 = vmatpush.msra.mxu0 0.0
    %176 = vmatpush.msra.mxu0 0.0
    %177 = vmatpush.msra.mxu0 0.0
    %178 = vmatpush.msra.mxu0 0.0
    %179 = vmatpush.msra.mxu0 0.0
    %180 = vmatpush.msra.mxu0 0.0
    %181 = vmatpush.msra.mxu0 0.0
    %182 = vmatpush.msra.mxu0 0.0
    %183 = vmatpush.msra.mxu0 0.0
    %184 = vmatpush.msra.mxu0 0.0
    %185 = vmatpush.msra.mxu0 0.0
    %186 = vmatpush.msra.mxu0 0.0
    %187 = vmatpush.msra.mxu0 0.0
    %188 = vmatpush.msra.mxu0 0.0
    %v189 = vand.u32 %v48, 4294901760
    %190 = vmatpush.msra.mxu0 %v189
    %v191 = vand.u32 %v44, 4294901760
    %192 = vmatmul.f32.gmra.mxu0 %v191
    %v193 = vpop.f32.mrf.mxu0
    %v194 = vadd.f32 %v172, %v193
    %195 = vdwg.mxu0
    %v196 = vand.u32 2147483647, %v194
    %vm197 = vcmp.le.f32.partialorder %v196, 0.7853982
    %vm198 = vcmp.lt.s32.totalorder %v194, 0
    %v199 = vand.u32 %v194, 2139095040
    %v200 = vshrl.u32 %v199, 23
    %v201 = vsub.s32 %v200, 127
    %v202 = vand.u32 2147483647, %v194
    %v203 = vand.u32 %v202, 8388607
    %v204 = vor.u32 %v203, 8388608
    %v205 = vsub.s32 0, %v204
    %v206 = vadd.s32 %v201, 1
    %vm207 = vcmp.gt.s32.totalorder %v206, 0
    %v208 = vsel %vm207, %v206, 0
    %v209 = vshrl.u32 %v208, 5
    %v210 = vand.u32 %v208, 31
    %v211 = vsub.s32 32, %v210
    %v212 = vshrl.u32 683565275, %v211
    %v213 = vshll.u32 683565275, %v210
    %v214 = vshrl.u32 2475754826, %v211
    %v215 = vor.u32 %v213, %v214
    %v216 = vshll.u32 2475754826, %v210
    %v217 = vshrl.u32 2131351028, %v211
    %v218 = vor.u32 %v216, %v217
    %v219 = vshll.u32 2131351028, %v210
    %v220 = vshrl.u32 2102212464, %v211
    %v221 = vor.u32 %v219, %v220
    %v222 = vshll.u32 2102212464, %v210
    %v223 = vshrl.u32 920167782, %v211
    %v224 = vor.u32 %v222, %v223
    %v225 = vshll.u32 920167782, %v210
    %v226 = vshrl.u32 1326507024, %v211
    %v227 = vor.u32 %v225, %v226
    %vm228 = vcmp.lt.s32.totalorder %v209, 1
    %vm229 = vcmp.lt.s32.totalorder %v209, 2
    %vm230 = vcmp.lt.s32.totalorder %v209, 3
    %vm231 = vcmp.lt.s32.totalorder %v209, 4
    %v232 = vsel %vm228, %v212, %v215
    %v233 = vsel %vm231, %v221, 2102212464
    %v234 = vsel %vm230, %v218, %v233
    %v235 = vsel %vm229, %v232, %v234
    %v236 = vsel %vm228, %v215, %v218
    %v237 = vsel %vm231, %v224, 920167782
    %v238 = vsel %vm230, %v221, %v237
    %v239 = vsel %vm229, %v236, %v238
    %v240 = vsel %vm228, %v218, %v221
    %v241 = vsel %vm231, %v227, 1326507024
    %v242 = vsel %vm230, %v224, %v241
    %v243 = vsel %vm229, %v240, %v242
    %v244 = vshll.u32 %v204, 8
    %v245 = vand.u32 %v244, 65535
    %v246 = vshrl.u32 %v244, 16
    %v247 = vand.u32 %v243, 65535
    %v248 = vshrl.u32 %v243, 16
    %v249 = vmul.u32 %v245, %v247
    %v250 = vmul.u32 %v245, %v248
    %v251 = vmul.u32 %v246, %v247
    %v252 = vmul.u32 %v246, %v248
    %v253 = vshll.u32 %v250, 16
    %v254 = vshrl.u32 %v250, 16
    %v255 = vshll.u32 %v251, 16
    %v256 = vshrl.u32 %v251, 16
    %vm257 = vc.u32 %v249, %v253
    %v258 = vsel %vm257, 1, 0
    %v259 = vadd.s32 %v249, %v253
    %v260 = vadd.s32 %v252, %v258
    %vm261 = vc.u32 %v259, %v255
    %v262 = vsel %vm261, 1, 0
    %v263 = vadd.s32 %v259, %v255
    %v264 = vadd.s32 %v260, %v262
    %v265 = vadd.s32 %v264, %v254
    %v266 = vadd.s32 %v265, %v256
    %v267 = vand.u32 %v244, 65535
    %v268 = vshrl.u32 %v244, 16
    %v269 = vand.u32 %v239, 65535
    %v270 = vshrl.u32 %v239, 16
    %v271 = vmul.u32 %v267, %v269
    %v272 = vmul.u32 %v267, %v270
    %v273 = vmul.u32 %v268, %v269
    %v274 = vmul.u32 %v268, %v270
    %v275 = vshll.u32 %v272, 16
    %v276 = vshrl.u32 %v272, 16
    %v277 = vshll.u32 %v273, 16
    %v278 = vshrl.u32 %v273, 16
    %vm279 = vc.u32 %v271, %v275
    %v280 = vsel %vm279, 1, 0
    %v281 = vadd.s32 %v271, %v275
    %v282 = vadd.s32 %v274, %v280
    %vm283 = vc.u32 %v281, %v277
    %v284 = vsel %vm283, 1, 0
    %v285 = vadd.s32 %v281, %v277
    %v286 = vadd.s32 %v282, %v284
    %v287 = vadd.s32 %v286, %v276
    %v288 = vadd.s32 %v287, %v278
    %v289 = vmul.u32 %v244, %v235
    %v290 = vadd.s32 %v266, %v285
    %vm291 = vc.u32 %v266, %v285
    %v292 = vadd.s32 %v288, 1
    %v293 = vsel %vm291, %v292, %v288
    %v294 = vadd.s32 %v289, %v293
    %v295 = vadd.s32 %v294, 536870912
    %v296 = vshrl.u32 %v295, 30
    %v297 = vshll.u32 %v296, 30
    %v298 = vsub.s32 %v294, %v297
    %vm299 = vcmp.lt.s32.totalorder %v298, 0
    %v300 = vsub.s32 0, %v298
    %v301 = vsel %vm299, %v300, %v298
    %v302 = vclz %v301
    %v303 = vsub.s32 %v302, 2
    %vm304 = vcmp.gt.s32.totalorder 0, %v303
    %v305 = vsel %vm304, 0, %v303
    %v306 = vsub.s32 32, %v305
    %v307 = vshll.u32 %v298, %v305
    %v308 = vshrl.u32 %v290, %v306
    %v309 = vor.u32 %v307, %v308
    %v310 = vsub.s32 4294967266, %v305
    %v311 = vadd.s32 %v310, 127
    %v312 = vshll.u32 %v311, 23
    %v313 = vor.u32 4788187, %v312
    %v314 = vand.u32 2147483647, %v313
    %v316 = vcvt.s32.f32 %v309
    %v317 = vmul.f32 %v316, %v314
    %v318 = vxor.u32 %v317, 2147483648
    %v319 = vsel %vm198, %v318, %v317
    %v320 = vsub.s32 4, %v296
    %v321 = vsel %vm198, %v320, %v296
    %v322 = vsel %vm197, %v194, %v319
    %v323 = vsel %vm197, 0, %v321
    %v324 = vmul.f32 %v322, %v322
    %v325 = vmul.f32 %v324, -0.001358992
    %v326 = vadd.f32 %v325, 0.041655596
    %v327 = vmul.f32 %v324, %v326
    %v328 = vadd.f32 %v327, -0.4999988
    %v329 = vmul.f32 %v324, %v328
    %v330 = vadd.f32 1.0, %v329
    %v331 = vmul.f32 %v322, %v322
    %v332 = vmul.f32 %v331, -0.00019511016
    %v333 = vadd.f32 %v332, 0.008332121
    %v334 = vmul.f32 %v331, %v333
    %v335 = vadd.f32 %v334, -0.16666654
    %v336 = vmul.f32 %v331, %v335
    %v337 = vadd.f32 %v336, 1.0
    %v338 = vmul.f32 %v337, %v322
    %vm339 = vweird.f32 %v194
    %v340 = vadd.s32 %v323, 3
    %v341 = vand.u32 %v340, 3
    %vm342 = vcmp.lt.s32.totalorder %v341, 2
    %vm343 = vcmp.eq.s32.totalorder %v341, 0
    %v344 = vxor.u32 %v338, 2147483648
    %v345 = vsel %vm343, %v330, %v344
    %vm346 = vcmp.eq.s32.totalorder %v341, 2
    %v347 = vxor.u32 %v330, 2147483648
    %v348 = vsel %vm346, %v347, %v338
    %v349 = vsel %vm342, %v345, %v348
    %v350 = vsel %vm339, nan, %v349
    %351 = vst [vmem:[#allocation7] sm:$0xff] %v350
    // Predicated region
    $region18: #{tpu_custom_call.1} parent=1 // pred_check
      _
    $region19: #{tpu_custom_call.1} parent=1 // pred_check_branch
      %353 = sbr.rel (0) target = $region21
    $region20: #{tpu_custom_call.1} parent=1 // pred_region
      %355 = vsyncadd [#allocation4], 0
      %s357 = sshll.u32 [#allocation7], 4
      %s358 = int_to_ptr.vmem [resolvable:$true] %s357
      %s359 = sshll.u32 %s2, 4
      %s360 = int_to_ptr.hbm [resolvable:$true] %s359
      %362 = dma.vmem_to_hbm [thread:$0]  %s358, 128, %s360, [#allocation4]
    $region21: #{tpu_custom_call.1} parent=1 // pred_fallthru
      _
    // Predicated region
    $region22: #{tpu_custom_call.1} parent=1 // pred_check
      _
    $region23: #{tpu_custom_call.1} parent=1 // pred_check_branch
      %364 = sbr.rel (0) target = $region25
    $region24: #{tpu_custom_call.1} parent=1 // pred_region
      %366 = dma.done [#allocation4], 128
    $region25: #{tpu_custom_call.1} parent=1 // pred_fallthru
      _
    %367 = vsyncpa [#allocation3], 1
    %368 = vsyncpa [#allocation6], 1
    %369 = vsyncpa [#allocation4], 1

</llo_original>
